<compile_context>
chip_gen: v6e
topology: v6e:2x2x1
jax: 0.10.0
libtpu: 0.0.40
codegen_flags: <defaults>
</compile_context>

<pallas_src>
import functools

import jax
import jax.numpy as jnp
import numpy as np
from jax import lax
from jax.experimental import pallas as pl
from jax.experimental.pallas import tpu as pltpu

K = 7    # conv kernel size
PAD = 3  # reflect padding


def _reflect_matrix(n: int, pad: int) -> np.ndarray:
    """R[p, i] = 1 iff i == reflect(p - pad); shape (n + 2*pad, n). Requires n > pad."""
    t = np.abs(np.arange(-pad, n + pad))
    t = np.where(t >= n, 2 * n - 2 - t, t)
    r = np.zeros((n + 2 * pad, n), np.float32)
    r[np.arange(n + 2 * pad), t] = 1.0
    return r


# ------------------------- pass 1: channel mean / max (HBM streaming) -------------------

def _channel_reduce_kernel(x_ref, o_ref, *, C, tc):
    # x_ref: (1, tc, HW) block of the input (native dtype), lane-dense.
    # o_ref: (1, 2, HW) f32, resident across the channel-block axis:
    #        row 0 = running sum (-> mean at the end), row 1 = running max.
    c_blk = pl.program_id(1)
    n_cblk = pl.num_programs(1)
    hw = o_ref.shape[2]

    @pl.when(c_blk == 0)
    def _init():
        o_ref[0, 0:1, :] = jnp.zeros((1, hw), jnp.float32)
        o_ref[0, 1:2, :] = jnp.full((1, hw), -jnp.inf, jnp.float32)

    def _accum(xblk):
        xf = xblk.astype(jnp.float32)
        o_ref[0, 0:1, :] += jnp.sum(xf, axis=0, keepdims=True)
        o_ref[0, 1:2, :] = jnp.maximum(o_ref[0, 1:2, :],
                                       jnp.max(xf, axis=0, keepdims=True))

    rem = C % tc  # static
    if rem == 0:
        _accum(x_ref[0])
    else:
        # Only the tail block pays the partial-slice path; full blocks are unmasked.
        @pl.when(c_blk < n_cblk - 1)
        def _full():
            _accum(x_ref[0])

        @pl.when(c_blk == n_cblk - 1)
        def _tail():
            _accum(x_ref[0, :rem, :])

    @pl.when(c_blk == n_cblk - 1)
    def _finalize():
        o_ref[0, 0:1, :] = o_ref[0, 0:1, :] * (1.0 / C)


# ------------------------- pass 2: 7x7 reflect-pad conv (per image, MXU) ----------------

def _conv7x7_kernel(xm_ref, rh_ref, g_ref, b_ref, o_ref, *, H, W):
    # xm_ref: (1, 2, H, W) f32 (channel 0 = mean, 1 = max); rh_ref: (H+6, H);
    # g_ref: (2*K, W, W) column pad + kj taps folded; b_ref: (1,) f32 in SMEM.
    acc = jnp.full((H, W), b_ref[0], jnp.float32)
    for c in range(2):
        xc = xm_ref[0, c]                                                    # (H, W)
        u = jnp.dot(rh_ref[...], xc, preferred_element_type=jnp.float32)     # (H+6, W)
        for ki in range(K):
            acc = acc + jnp.dot(u[ki:ki + H, :], g_ref[c * K + ki],
                                preferred_element_type=jnp.float32)
    o_ref[...] = acc[None, None, :, :].astype(o_ref.dtype)


# ------------------------- wrapper -------------------------------------------------------

def _pick_vmem_limit():
    cap = 64 * 1024 * 1024  # conservative fallback = v7x physical VMEM
    try:
        info = pltpu.get_tpu_info()
        cap = int(getattr(info, "vmem_capacity_bytes", cap) or cap)
    except Exception:
        pass
    # 128-MiB parts (v5e/v6e) -> 96 MiB scoped limit; 64-MiB parts (v7x) -> 48 MiB.
    return int(min(96 * 1024 * 1024, (cap * 3) // 4))


def _pick_channel_block(C, hw, itemsize, vmem_limit):
    # Per streamed channel: double-buffered input block + the in-kernel f32 cast temp.
    per_ch = hw * (2 * itemsize + 4)
    # Reserve the double-buffered (2, hw) f32 output accumulator + general headroom.
    budget = max(per_ch, int(vmem_limit * 0.7) - 16 * hw)
    tc = max(1, budget // per_ch)
    if tc >= C:
        return C
    return int(min(C, max(8, (tc // 8) * 8)))


def spatial_attention(x, w, b, *, channel_block=None, vmem_limit_bytes=None):
    """x: (N, C, H, W), w: (1, 2, 7, 7), b: (1,) -> (N, 1, H, W) in x.dtype."""
    N, C, H, W = x.shape
    if H <= PAD or W <= PAD:
        raise ValueError(f"reflect padding of {PAD} requires H, W > {PAD}; got {H}x{W}")
    hw = H * W

    if vmem_limit_bytes is None:
        vmem_limit_bytes = _pick_vmem_limit()
    if channel_block is None:
        channel_block = _pick_channel_block(C, hw, x.dtype.itemsize, vmem_limit_bytes)
    tc = int(channel_block)
    n_cblk = pl.cdiv(C, tc)

    # ---- pass 1: lane-dense channel mean / max streaming reduction ----
    x_flat = x.reshape(N, C, hw)  # free metadata reshape (row-major contiguous)
    reduce_kernel = functools.partial(_channel_reduce_kernel, C=C, tc=tc)
    red = pl.pallas_call(
        reduce_kernel,
        out_shape=jax.ShapeDtypeStruct((N, 2, hw), jnp.float32),
        grid=(N, n_cblk),
        in_specs=[pl.BlockSpec((1, tc, hw), lambda n, c: (n, c, 0))],
        out_specs=pl.BlockSpec((1, 2, hw), lambda n, c: (n, 0, 0)),
        compiler_params=pltpu.CompilerParams(
            dimension_semantics=("parallel", "arbitrary"),
            vmem_limit_bytes=int(vmem_limit_bytes),
        ),
    )(x_flat)

    # ---- host-side conv constants (static in H/W) ----
    w2 = jnp.asarray(w, jnp.float32).reshape(2, K, K)
    b1 = jnp.asarray(b, jnp.float32).reshape(1)
    rh = jnp.asarray(_reflect_matrix(H, PAD))                          # (H+6, H)
    rw = _reflect_matrix(W, PAD)                                       # (W+6, W) numpy
    # rw_slices[kj][j, w] = Rw[w + kj, j]  (pre-transposed right operands)
    rw_slices = jnp.asarray(np.stack([rw[kj:kj + W, :].T for kj in range(K)], axis=0))
    # G[c, ki] = sum_kj w[c, ki, kj] * rw_slices[kj]  -> column pad + kj taps fused.
    g = jnp.einsum("cik,kab->ciab", w2, rw_slices).reshape(2 * K, W, W)

    # ---- pass 2: per-image 7x7 reflect-pad conv ----
    conv_kernel = functools.partial(_conv7x7_kernel, H=H, W=W)
    out = pl.pallas_call(
        conv_kernel,
        out_shape=jax.ShapeDtypeStruct((N, 1, H, W), x.dtype),
        grid=(N,),
        in_specs=[
            pl.BlockSpec((1, 2, H, W), lambda n: (n, 0, 0, 0)),        # mean/max map
            pl.BlockSpec((H + 2 * PAD, H), lambda n: (0, 0)),          # row reflect matrix
            pl.BlockSpec((2 * K, W, W), lambda n: (0, 0, 0)),          # folded column taps
            pl.BlockSpec(memory_space=pltpu.MemorySpace.SMEM),         # bias scalar
        ],
        out_specs=pl.BlockSpec((1, 1, H, W), lambda n: (n, 0, 0, 0)),
        compiler_params=pltpu.CompilerParams(
            dimension_semantics=("parallel",),
            vmem_limit_bytes=int(vmem_limit_bytes),
        ),
    )(red.reshape(N, 2, H, W), rh, g, b1)
    return out


def _reference(x, w, b):
    x_avg = jnp.mean(x, axis=1, keepdims=True)
    x_max = jnp.max(x, axis=1, keepdims=True)
    x2 = jnp.concatenate([x_avg, x_max], axis=1)
    x2p = jnp.pad(x2, ((0, 0), (0, 0), (PAD, PAD), (PAD, PAD)), mode="reflect")
    out = lax.conv_general_dilated(
        x2p, w, window_strides=(1, 1), padding="VALID",
        dimension_numbers=("NCHW", "OIHW", "NCHW"))
    return out + b.reshape(1, -1, 1, 1)


if __name__ == "__main__":
    key = jax.random.PRNGKey(0)
    kx, kw, kb = jax.random.split(key, 3)

    N, C, H, W = 2, 4, 16, 16
    x = jax.random.normal(kx, (N, C, H, W), dtype=jnp.float32)

    # Deterministic Conv2d(2, 1, 7, bias=True) params (kaiming-uniform-like range).
    fan_in = 2 * K * K
    bound = 1.0 / np.sqrt(fan_in)
    w = jax.random.uniform(kw, (1, 2, K, K), jnp.float32, -bound, bound)
    b = jax.random.uniform(kb, (1,), jnp.float32, -bound, bound)

    out = spatial_attention(x, w, b)
    out = jax.block_until_ready(out)

    ref = jax.block_until_ready(_reference(x, w, b))
    np.testing.assert_allclose(np.asarray(out), np.asarray(ref), rtol=1e-4, atol=2e-4)

    print("KERNEL_OK")
</pallas_src>

<mosaic_0001>
module attributes {stable_mosaic.version = 11 : i64} {
  func.func @_channel_reduce_kernel(%arg0: i32, %arg1: i32, %arg2: memref<1x4x256xf32, #tpu.memory_space<vmem>>, %arg3: memref<1x2x256xf32, #tpu.memory_space<vmem>>) attributes {dimension_semantics = [#tpu.dimension_semantics<parallel>, #tpu.dimension_semantics<arbitrary>], iteration_bounds = array<i64: 2, 1>, scalar_prefetch = 0 : i64, scratch_operands = 0 : i64, tpu.core_type = #tpu.core_type<tc>, window_params = [{transform_indices = @transform_0, window_bounds = array<i64: 1, 4, 256>}, {transform_indices = @transform_1, window_bounds = array<i64: 1, 2, 256>}]} {
    %c0_i32 = arith.constant 0 : i32
    %0 = arith.cmpi eq, %arg1, %c0_i32 : i32
    %1 = arith.extui %0 : i1 to i32
    %c0_i32_0 = arith.constant 0 : i32
    %2 = arith.cmpi ne, %1, %c0_i32_0 : i32
    scf.if %2 {
      %cst_17 = arith.constant 0.000000e+00 : f32
      %24 = vector.broadcast %cst_17 : f32 to vector<1x256xf32>
      %c0_18 = arith.constant 0 : index
      %c0_19 = arith.constant 0 : index
      %c0_20 = arith.constant 0 : index
      %25 = vector.load %arg3[%c0_18, %c0_19, %c0_20] : memref<1x2x256xf32, #tpu.memory_space<vmem>>, vector<1x1x256xf32>
      %26 = vector.shape_cast %25 : vector<1x1x256xf32> to vector<1x256xf32>
      %27 = vector.shape_cast %24 : vector<1x256xf32> to vector<1x1x256xf32>
      tpu.vector_store %arg3[%c0_18, %c0_19, %c0_20], %27 {strides = array<i32>} : memref<1x2x256xf32, #tpu.memory_space<vmem>>, vector<1x1x256xf32>,
      %cst_21 = arith.constant 0xFF800000 : f32
      %28 = vector.broadcast %cst_21 : f32 to vector<1x256xf32>
      %c0_22 = arith.constant 0 : index
      %c1_23 = arith.constant 1 : index
      %c0_24 = arith.constant 0 : index
      %29 = vector.load %arg3[%c0_22, %c1_23, %c0_24] : memref<1x2x256xf32, #tpu.memory_space<vmem>>, vector<1x1x256xf32>
      %30 = vector.shape_cast %29 : vector<1x1x256xf32> to vector<1x256xf32>
      %31 = vector.shape_cast %28 : vector<1x256xf32> to vector<1x1x256xf32>
      tpu.vector_store %arg3[%c0_22, %c1_23, %c0_24], %31 {strides = array<i32>} : memref<1x2x256xf32, #tpu.memory_space<vmem>>, vector<1x1x256xf32>,
    } else {
    }
    %c0 = arith.constant 0 : index
    %c0_1 = arith.constant 0 : index
    %c0_2 = arith.constant 0 : index
    %3 = vector.load %arg2[%c0, %c0_1, %c0_2] : memref<1x4x256xf32, #tpu.memory_space<vmem>>, vector<1x4x256xf32>
    %4 = vector.shape_cast %3 : vector<1x4x256xf32> to vector<4x256xf32>
    %c0_3 = arith.constant 0 : index
    %c0_4 = arith.constant 0 : index
    %c0_5 = arith.constant 0 : index
    %5 = vector.load %arg3[%c0_3, %c0_4, %c0_5] : memref<1x2x256xf32, #tpu.memory_space<vmem>>, vector<1x1x256xf32>
    %6 = vector.shape_cast %5 : vector<1x1x256xf32> to vector<1x256xf32>
    %cst = arith.constant dense<0.000000e+00> : vector<256xf32>
    %7 = vector.multi_reduction <add>, %4, %cst [0] : vector<4x256xf32> to vector<256xf32>
    %8 = vector.shape_cast %7 : vector<256xf32> to vector<1x256xf32>
    %9 = arith.addf %6, %8 : vector<1x256xf32>
    %c0_6 = arith.constant 0 : index
    %c0_7 = arith.constant 0 : index
    %c0_8 = arith.constant 0 : index
    %10 = vector.load %arg3[%c0_6, %c0_7, %c0_8] : memref<1x2x256xf32, #tpu.memory_space<vmem>>, vector<1x1x256xf32>
    %11 = vector.shape_cast %10 : vector<1x1x256xf32> to vector<1x256xf32>
    %12 = vector.shape_cast %9 : vector<1x256xf32> to vector<1x1x256xf32>
    tpu.vector_store %arg3[%c0_6, %c0_7, %c0_8], %12 {strides = array<i32>} : memref<1x2x256xf32, #tpu.memory_space<vmem>>, vector<1x1x256xf32>,
    %c0_9 = arith.constant 0 : index
    %c1 = arith.constant 1 : index
    %c0_10 = arith.constant 0 : index
    %13 = vector.load %arg3[%c0_9, %c1, %c0_10] : memref<1x2x256xf32, #tpu.memory_space<vmem>>, vector<1x1x256xf32>
    %14 = vector.shape_cast %13 : vector<1x1x256xf32> to vector<1x256xf32>
    %cst_11 = arith.constant dense<0xFF800000> : vector<256xf32>
    %15 = vector.multi_reduction <maximumf>, %4, %cst_11 [0] : vector<4x256xf32> to vector<256xf32>
    %16 = vector.shape_cast %15 : vector<256xf32> to vector<1x256xf32>
    %17 = arith.maximumf %14, %16 : vector<1x256xf32>
    %c0_12 = arith.constant 0 : index
    %c1_13 = arith.constant 1 : index
    %c0_14 = arith.constant 0 : index
    %18 = vector.load %arg3[%c0_12, %c1_13, %c0_14] : memref<1x2x256xf32, #tpu.memory_space<vmem>>, vector<1x1x256xf32>
    %19 = vector.shape_cast %18 : vector<1x1x256xf32> to vector<1x256xf32>
    %20 = vector.shape_cast %17 : vector<1x256xf32> to vector<1x1x256xf32>
    tpu.vector_store %arg3[%c0_12, %c1_13, %c0_14], %20 {strides = array<i32>} : memref<1x2x256xf32, #tpu.memory_space<vmem>>, vector<1x1x256xf32>,
    %c0_i32_15 = arith.constant 0 : i32
    %21 = arith.cmpi eq, %arg1, %c0_i32_15 : i32
    %22 = arith.extui %21 : i1 to i32
    %c0_i32_16 = arith.constant 0 : i32
    %23 = arith.cmpi ne, %22, %c0_i32_16 : i32
    scf.if %23 {
      %c0_17 = arith.constant 0 : index
      %c0_18 = arith.constant 0 : index
      %c0_19 = arith.constant 0 : index
      %24 = vector.load %arg3[%c0_17, %c0_18, %c0_19] : memref<1x2x256xf32, #tpu.memory_space<vmem>>, vector<1x1x256xf32>
      %25 = vector.shape_cast %24 : vector<1x1x256xf32> to vector<1x256xf32>
      %cst_20 = arith.constant 2.500000e-01 : f32
      %26 = vector.broadcast %cst_20 : f32 to vector<1x256xf32>
      %27 = arith.mulf %25, %26 : vector<1x256xf32>
      %c0_21 = arith.constant 0 : index
      %c0_22 = arith.constant 0 : index
      %c0_23 = arith.constant 0 : index
      %28 = vector.load %arg3[%c0_21, %c0_22, %c0_23] : memref<1x2x256xf32, #tpu.memory_space<vmem>>, vector<1x1x256xf32>
      %29 = vector.shape_cast %28 : vector<1x1x256xf32> to vector<1x256xf32>
      %30 = vector.shape_cast %27 : vector<1x256xf32> to vector<1x1x256xf32>
      tpu.vector_store %arg3[%c0_21, %c0_22, %c0_23], %30 {strides = array<i32>} : memref<1x2x256xf32, #tpu.memory_space<vmem>>, vector<1x1x256xf32>,
    } else {
    }
    return
  }
  func.func @transform_0(%arg0: i32, %arg1: i32) -> (i32, i32, i32) {
    %c0_i32 = arith.constant 0 : i32
    %c0_i32_0 = arith.constant 0 : i32
    return %arg0, %arg1, %c0_i32 : i32, i32, i32
  }
  func.func @transform_1(%arg0: i32, %arg1: i32) -> (i32, i32, i32) {
    %c0_i32 = arith.constant 0 : i32
    %c0_i32_0 = arith.constant 0 : i32
    %c0_i32_1 = arith.constant 0 : i32
    return %arg0, %c0_i32, %c0_i32_0 : i32, i32, i32
  }
}

</mosaic_0001>

<llo_original>
// kernel: tpu_custom_call.1
$region0: #{tpu_custom_call.1}
  #allocation0 [shape = 'u32[]', space=smem, size = 0x4, offset = 0x4, fixed_abs, tag = 'smem constant byte address 0x4 - core index']
  #allocation1 [shape = 'u32[144,128]{1,0:T(1,128)}', space=vmem, size = 0x12000, scoped, tag = 'internal scratch']
  %s0 = inlined_call_operand.hbm [shape: f32[2,4,256], index: 0, kind: input, shape index: {}]
  %s1 = inlined_call_operand.hbm [shape: f32[2,2,256], index: 1, kind: output, shape index: {}]
  %s2 = sld [smem:[#allocation0]]
  $region49: #{tpu_custom_call.1} parent=0
    _
  %s4 = ssub.s32 1, %s2
  %s5 = scalar_select 0, %s4, %s2
  $region1: #{tpu_custom_call.1} parent=0
    #allocation2 [shape = 'u8[8192]{0}', space=vmem, size = 0x2000, scoped, tag = 'input window, operand 0']
    #allocation3 [shape = 's32[2]{0}', space=sflag, size = 0x8, scoped, tag = 'scoped memory for tpu_custom_call.1']
    #allocation4 [shape = 's32[2]{0}', space=sflag, size = 0x8, scoped, tag = 'scoped memory for tpu_custom_call.1']
    #allocation5 [shape = 'u8[4096]{0}', space=vmem, size = 0x1000, scoped, tag = 'output window, operand 0']
    %6 = vsyncpa [#allocation3], 0
    %s7 = scalar_lea.sflag [#allocation3], 1
    %8 = vsyncpa %s7, 0
    %9 = vsyncpa [#allocation4], 0
    %s10 = scalar_lea.sflag [#allocation4], 1
    %11 = vsyncpa %s10, 0
    loop: start=0, step=1, limit=4
    $region2: #{tpu_custom_call.1} parent=1 // loop_pre_header
      _
    $region3: #{tpu_custom_call.1} parent=1 // loop_header
      %s13 = sphi 0, %s17
      %p14 = scmp.ge.s32.totalorder %s13, 4
      %s20 = sphi 0, %s32
      %s21 = sphi 0, %s28
      %s22 = sphi 0, %s20
      %s23 = sphi 0, %s21
      %s24 = sphi 0, %s22
      %s25 = sphi 0, %s23
      %s37 = sphi 0, %s39
      %s40 = sphi 0, %s37
      %s41 = sphi 0, %s40
      %s57 = sphi 0, %s41
      %s63 = sphi 0, %s65
      %s66 = sphi 0, %s63
      %s67 = sphi 0, %s66
      %s83 = sphi 0, %s67
    $region4: #{tpu_custom_call.1} parent=1 // loop_header_branch
      %16 = sbr.rel (%p14) target = $region8
    $region5: #{tpu_custom_call.1} parent=1 // loop_body
      %s18 = ssub.s32 %s13, 1
      %s19 = ssub.s32 %s13, 2
      %s26 = sadd.s32 1, %s21
      %p27 = scmp.ge.s32.totalorder %s26, 1
      %s28 = scalar_select %p27, 0, %s26
      %s29 = sadd.s32 1, %s20
      %s30 = scalar_select %p27, %s29, %s20
      %p31 = scmp.ge.s32.totalorder %s30, 2
      %s32 = scalar_select %p31, 0, %s30
      %s33 = ssub.s32 %s20, %s32
      %s34 = ssub.s32 %s21, %s28
      %s35 = sor.u32 %s33, %s34
      %p36 = scmp.eq.s32.totalorder %s35, 0
      %s38 = sadd.s32 %s37, 1
      %s39 = scalar_select %p36, %s37, %s38
      %p42 = pneg %p36
      %p43 = scmp.eq.s32.totalorder %s13, 1
      %p44 = por %p42, %p43
      %p45 = scmp.ne.s32.totalorder %s37, %s40
      %p46 = scmp.eq.s32.totalorder %s13, 0
      %p47 = por %p45, %p46
      %p48 = scmp.ne.s32.totalorder %s37, %s40
      %p49 = scmp.eq.s32.totalorder %s18, 1
      %p50 = por %p48, %p49
      %p51 = scmp.ne.s32.totalorder %s40, %s41
      %p52 = scmp.eq.s32.totalorder %s18, 0
      %p53 = por %p51, %p52
      %p54 = scmp.ne.s32.totalorder %s40, %s41
      %p55 = scmp.eq.s32.totalorder %s19, 1
      %p56 = por %p54, %p55
      %p58 = scmp.ne.s32.totalorder %s41, %s57
      %p59 = scmp.eq.s32.totalorder %s19, 0
      %p60 = por %p58, %p59
      %s61 = ssub.s32 %s20, %s32
      %p62 = scmp.eq.s32.totalorder %s61, 0
      %s64 = sadd.s32 %s63, 1
      %s65 = scalar_select %p62, %s63, %s64
      %p68 = pneg %p62
      %p69 = scmp.eq.s32.totalorder %s13, 1
      %p70 = por %p68, %p69
      %p71 = scmp.ne.s32.totalorder %s63, %s66
      %p72 = scmp.eq.s32.totalorder %s13, 0
      %p73 = por %p71, %p72
      %p74 = scmp.ne.s32.totalorder %s63, %s66
      %p75 = scmp.eq.s32.totalorder %s18, 1
      %p76 = por %p74, %p75
      %p77 = scmp.ne.s32.totalorder %s66, %s67
      %p78 = scmp.eq.s32.totalorder %s18, 0
      %p79 = por %p77, %p78
      %p80 = scmp.ne.s32.totalorder %s66, %s67
      %p81 = scmp.eq.s32.totalorder %s19, 1
      %p82 = por %p80, %p81
      %p84 = scmp.ne.s32.totalorder %s67, %s83
      %p85 = scmp.eq.s32.totalorder %s19, 0
      %p86 = por %p84, %p85
      %p87 = scmp.le.s32.totalorder 1, %s13
      %p88 = scmp.lt.s32.totalorder %s13, 3
      %p89 = pnand %p87, %p88
      %p90 = pneg %p89
      // Predicated region
      $region9: #{tpu_custom_call.1} parent=5 // pred_check
        _
      $region10: #{tpu_custom_call.1} parent=5 // pred_check_branch
        %92 = sbr.rel (%p89) target = $region12
      $region11: #{tpu_custom_call.1} parent=5 // pred_region
        %s93 = ssub.s32 %s13, 1
      $region12: #{tpu_custom_call.1} parent=5 // pred_fallthru
        _
      %p94 = scmp.lt.s32.totalorder %s13, 2
      // Predicated region
      $region13: #{tpu_custom_call.1} parent=5 // pred_check
        %p95 = pneg %p94
      $region14: #{tpu_custom_call.1} parent=5 // pred_check_branch
        %97 = sbr.rel (%p95) target = $region16
      $region15: #{tpu_custom_call.1} parent=5 // pred_region
        // Predicated region
        $region17: #{tpu_custom_call.1} parent=15 // pred_check
          %p98 = pneg %p47
        $region18: #{tpu_custom_call.1} parent=15 // pred_check_branch
          %100 = sbr.rel (%p98) target = $region20
        $region19: #{tpu_custom_call.1} parent=15 // pred_region
          %s101 = sand.u32 %s37, 1
          %s102 = scalar_lea.sflag [#allocation3], %s101
          %s103 = sand.u32 %s37, 1
          %s104 = smul.addr %s103, 8
          %s105 = scalar_lea.vmem [#allocation2], %s104
          %s107 = ssub.s32 128, 128
          %108 = vsyncadd %s102, %s107
          %s109 = smul.addr %s21, 2
          %s110 = smul.addr %s20, 2
          %s111 = sadd.s32 %s109, %s110
          %s112 = smul.addr %s111, 64
          %s113 = scalar_lea.hbm %s0, %s112
          %s115 = sshll.u32 %s105, 4
          %s116 = int_to_ptr.vmem [resolvable:$true] %s115
          %118 = dma.hbm_to_vmem [thread:$0]  %s113, 128, %s116, %s102
        $region20: #{tpu_custom_call.1} parent=15 // pred_fallthru
          _
      $region16: #{tpu_custom_call.1} parent=5 // pred_fallthru
        _
      %p119 = scmp.le.s32.totalorder 1, %s13
      %p120 = scmp.lt.s32.totalorder %s13, 3
      %p121 = pnand %p119, %p120
      %p122 = pneg %p121
      // Predicated region
      $region21: #{tpu_custom_call.1} parent=5 // pred_check
        _
      $region22: #{tpu_custom_call.1} parent=5 // pred_check_branch
        %124 = sbr.rel (%p121) target = $region24
      $region23: #{tpu_custom_call.1} parent=5 // pred_region
        %s125 = ssub.s32 %s13, 1
        %s126 = sand.u32 %s40, 1
        %s127 = scalar_lea.sflag [#allocation3], %s126
        %s128 = sand.u32 %s40, 1
        %s129 = smul.addr %s128, 8
        %s130 = scalar_lea.vmem [#allocation2], %s129
        // Predicated region
        $region25: #{tpu_custom_call.1} parent=23 // pred_check
          %p131 = pneg %p53
        $region26: #{tpu_custom_call.1} parent=23 // pred_check_branch
          %133 = sbr.rel (%p131) target = $region28
        $region27: #{tpu_custom_call.1} parent=23 // pred_region
          %134 = dma.done %s127, 128
        $region28: #{tpu_custom_call.1} parent=23 // pred_fallthru
          _
        %s135 = sand.u32 %s40, 1
        %s136 = scalar_lea.sflag [#allocation3], %s135
        %s137 = sand.u32 %s40, 1
        %s138 = smul.addr %s137, 8
        %s139 = scalar_lea.vmem [#allocation2], %s138
        %p140 = pneg %p53
        %p141 = pneg %p50
        %p142 = pneg %p79
        %p143 = pneg %p76
        %s144 = sand.u32 %s66, 1
        %s145 = scalar_lea.sflag [#allocation4], %s144
        %s146 = sand.u32 %s66, 1
        %s147 = smul.addr %s146, 4
        %s148 = scalar_lea.vmem [#allocation5], %s147
        %p149 = scmp.eq.s32.totalorder %s23, 0
        // Predicated region
        $region29: #{tpu_custom_call.1} parent=23 // pred_check
          %p150 = pneg %p149
        $region30: #{tpu_custom_call.1} parent=23 // pred_check_branch
          %152 = sbr.rel (%p150) target = $region32
        $region31: #{tpu_custom_call.1} parent=23 // pred_region
          %v153 = vlaneseq
          %vm154 = vcmp.ge.s32.totalorder %v153, 0
          %vm155 = vcmp.lt.s32.totalorder %v153, 256
          %vm156 = vmand %vm154, %vm155
          %157 = vst.msk [vmem:[%s148] ss:$2 sm:$0x3] %vm156, 0.0
          %s158 = scalar_lea.vmem %s148, 1 [#allocation5]
          %159 = vst.msk [vmem:[%s158] ss:$2 sm:$0x3] %vm156, -inf
        $region32: #{tpu_custom_call.1} parent=23 // pred_fallthru
          _
        %v160 = vld [vmem:[%s130] sm:$0xff]
        %v161 = vld [vmem:[%s148] ss:$2 sm:$0x3]
        %v163 = vcombine.high %v160, %v160
        %vm165 = vcmask 1043456
        %v166 = vsel %vm165, %v160, 0.0
        %v167 = vrot.slane %v166, 4
        %v168 = vadd.f32 %v166, %v167
        %v169 = vrot.slane %v168, 2
        %v170 = vadd.f32 %v168, %v169
        %v171 = vrot.slane %v170, 1
        %v172 = vadd.f32 %v170, %v171
        %v173 = vsel %vm165, %v163, 0.0
        %v174 = vrot.slane %v173, 4
        %v175 = vadd.f32 %v173, %v174
        %v176 = vrot.slane %v175, 2
        %v177 = vadd.f32 %v175, %v176
        %v178 = vrot.slane %v177, 1
        %v179 = vadd.f32 %v177, %v178
        %v182 = vcombine.low %v172, %v179
        %v184 = vunpack.c.l.s4 1966171168
        %v185 = vunpack.c.0.s8 %v184
        %v186 = vlaneseq
        %v187 = vshrl.u32 %v186, 7
        %v188 = vsub.s32 %v185, %v187
        %v189 = vrot.slane %v182, %v188
        %v191 = vunpack.c.l.s4 1966171168
        %v192 = vunpack.c.0.s8 %v191
        %v193 = vlaneseq
        %v194 = vshrl.u32 %v193, 7
        %v195 = vsub.s32 %v192, %v194
        %v196 = vrot.slane %v189, %v195
        %v198 = vadd.f32 %v161, %v196
        %v199 = vlaneseq
        %vm200 = vcmp.ge.s32.totalorder %v199, 0
        %vm201 = vcmp.lt.s32.totalorder %v199, 256
        %vm202 = vmand %vm200, %vm201
        %203 = vst.msk [vmem:[%s148] ss:$2 sm:$0x3] %vm202, %v198
        %s204 = scalar_lea.vmem %s148, 1 [#allocation5]
        %v205 = vld [vmem:[%s204] ss:$2 sm:$0x3]
        %v206 = vsel %vm165, %v160, -inf
        %v207 = vrot.slane %v206, 4
        %v208 = vmax.f32 %v206, %v207
        %v209 = vrot.slane %v208, 2
        %v210 = vmax.f32 %v208, %v209
        %v211 = vrot.slane %v210, 1
        %v212 = vmax.f32 %v210, %v211
        %v213 = vsel %vm165, %v163, -inf
        %v214 = vrot.slane %v213, 4
        %v215 = vmax.f32 %v213, %v214
        %v216 = vrot.slane %v215, 2
        %v217 = vmax.f32 %v215, %v216
        %v218 = vrot.slane %v217, 1
        %v219 = vmax.f32 %v217, %v218
        %v222 = vcombine.low %v212, %v219
        %v224 = vunpack.c.l.s4 1966171168
        %v225 = vunpack.c.0.s8 %v224
        %v226 = vlaneseq
        %v227 = vshrl.u32 %v226, 7
        %v228 = vsub.s32 %v225, %v227
        %v229 = vrot.slane %v222, %v228
        %v231 = vunpack.c.l.s4 1966171168
        %v232 = vunpack.c.0.s8 %v231
        %v233 = vlaneseq
        %v234 = vshrl.u32 %v233, 7
        %v235 = vsub.s32 %v232, %v234
        %v236 = vrot.slane %v229, %v235
        %v238 = vmax.f32 %v205, %v236
        %239 = vst.msk [vmem:[%s204] ss:$2 sm:$0x3] %vm202, %v238
        // Predicated region
        $region33: #{tpu_custom_call.1} parent=23 // pred_check
          %p240 = pneg %p149
        $region34: #{tpu_custom_call.1} parent=23 // pred_check_branch
          %242 = sbr.rel (%p240) target = $region36
        $region35: #{tpu_custom_call.1} parent=23 // pred_region
          %v243 = vld [vmem:[%s148] ss:$2 sm:$0x3]
          %v244 = vmul.f32 %v243, 0.25
          %245 = vst.msk [vmem:[%s148] ss:$2 sm:$0x3] %vm202, %v244
        $region36: #{tpu_custom_call.1} parent=23 // pred_fallthru
          _
        %s246 = sand.u32 %s66, 1
        %s247 = scalar_lea.sflag [#allocation4], %s246
        %s248 = sand.u32 %s66, 1
        %s249 = smul.addr %s248, 4
        %s250 = scalar_lea.vmem [#allocation5], %s249
        // Predicated region
        $region37: #{tpu_custom_call.1} parent=23 // pred_check
          %p251 = pneg %p76
        $region38: #{tpu_custom_call.1} parent=23 // pred_check_branch
          %253 = sbr.rel (%p251) target = $region40
        $region39: #{tpu_custom_call.1} parent=23 // pred_region
          %s255 = ssub.s32 64, 64
          %256 = vsyncadd %s247, %s255
          %s257 = smul.addr %s22, 2
          %s258 = smul.addr %s257, 32
          %s259 = scalar_lea.hbm %s1, %s258
          %s261 = sshll.u32 %s250, 4
          %s262 = int_to_ptr.vmem [resolvable:$true] %s261
          %264 = dma.vmem_to_hbm [thread:$0]  %s262, 64, %s259, %s247
        $region40: #{tpu_custom_call.1} parent=23 // pred_fallthru
          _
      $region24: #{tpu_custom_call.1} parent=5 // pred_fallthru
        _
      %p265 = scmp.le.s32.totalorder 2, %s13
      // Predicated region
      $region41: #{tpu_custom_call.1} parent=5 // pred_check
        %p266 = pneg %p265
      $region42: #{tpu_custom_call.1} parent=5 // pred_check_branch
        %268 = sbr.rel (%p266) target = $region44
      $region43: #{tpu_custom_call.1} parent=5 // pred_region
        %s269 = ssub.s32 %s13, 2
        // Predicated region
        $region45: #{tpu_custom_call.1} parent=43 // pred_check
          %p270 = pneg %p82
        $region46: #{tpu_custom_call.1} parent=43 // pred_check_branch
          %272 = sbr.rel (%p270) target = $region48
        $region47: #{tpu_custom_call.1} parent=43 // pred_region
          %s273 = sand.u32 %s67, 1
          %s274 = scalar_lea.sflag [#allocation4], %s273
          %s275 = sand.u32 %s67, 1
          %s276 = smul.addr %s275, 4
          %s277 = scalar_lea.vmem [#allocation5], %s276
          %278 = dma.done %s274, 64
        $region48: #{tpu_custom_call.1} parent=43 // pred_fallthru
          _
      $region44: #{tpu_custom_call.1} parent=5 // pred_fallthru
        _
    $region6: #{tpu_custom_call.1} parent=1 // loop_footer
      %s17 = sadd.s32 1, %s13
    $region7: #{tpu_custom_call.1} parent=1 // loop_footer_branch
      %12 = sbr.rel target = $region3
    $region8: #{tpu_custom_call.1} parent=1 // loop_exit
      _
    %279 = vsyncpa [#allocation3], 1
    %s280 = scalar_lea.sflag [#allocation3], 1
    %281 = vsyncpa %s280, 1
    %282 = vsyncpa [#allocation4], 1
    %s283 = scalar_lea.sflag [#allocation4], 1
    %284 = vsyncpa %s283, 1

</llo_original>
